<compile_context>
chip_gen: v5e
topology: v5e:2x2
jax: 0.10.0
libtpu: 0.0.40
codegen_flags: <defaults>
</compile_context>

<pallas_src>
import functools

import jax
import jax.numpy as jnp
from jax.experimental import pallas as pl
from jax.experimental.pallas import tpu as pltpu

N_EMBD = 32
FFWD_CONSTANT = 4
HIDDEN = FFWD_CONSTANT * N_EMBD   # 128
DROPOUT_P = 0.2
LANES = 128                       # TPU vreg lane width


def _ffwd_kernel(*refs, training: bool, p: float):
    """One (tm, C*pack) row tile of the packed feed-forward.

    refs (eval):  x, w1, b1, w2, b2, out
    refs (train): bits, x, w1, b1, w2, b2, out
    """
    if training:
        bits_ref, x_ref, w1_ref, b1_ref, w2_ref, b2_ref, o_ref = refs
    else:
        x_ref, w1_ref, b1_ref, w2_ref, b2_ref, o_ref = refs

    x = x_ref[...]

    # Linear 1 + ReLU  (MXU matmul, f32 accumulation; bias/ReLU on the VPU in f32).
    h = jnp.dot(x, w1_ref[...], preferred_element_type=jnp.float32)
    h = jnp.maximum(h + b1_ref[...], 0.0)

    # Linear 2.
    y = jnp.dot(h.astype(w2_ref.dtype), w2_ref[...],
                preferred_element_type=jnp.float32) + b2_ref[...]

    if training:
        # Inverted dropout: keep with prob (1-p), scale kept values by 1/(1-p).
        # Compare raw uint32 bits against an integer threshold (no float convert).
        threshold = jnp.uint32(min(int(p * 4294967296.0), 4294967295))
        keep = bits_ref[...] >= threshold
        y = jnp.where(keep, y * (1.0 / (1.0 - p)), 0.0)

    o_ref[...] = y.astype(o_ref.dtype)


def feedforward(x, w1, b1, w2, b2, *, training=False, p=DROPOUT_P, rng=None,
                block_rows=512, compute_dtype=None):
    """x: (B, T, C) -> (B, T, C).  Matches torch FeedForward.forward.

    compute_dtype: optional matmul-operand dtype (e.g. jnp.bfloat16 to halve
    HBM traffic on v5e/v6e); accumulation stays f32.  Default: x.dtype (f32).
    """
    B, T, C = x.shape
    C_in, H = w1.shape
    assert C_in == C and w2.shape == (H, C)
    M = B * T
    if compute_dtype is None:
        compute_dtype = x.dtype

    # ---- Lane-dense packing: put `pack` consecutive rows on the 128-lane axis.
    if LANES % C == 0 and M % (LANES // C) == 0:
        pack = LANES // C
    else:
        pack = 1                      # fallback: un-packed layout

    Mp, Cp, Hp = M // pack, C * pack, H * pack
    x2 = x.reshape(Mp, Cp).astype(compute_dtype)   # free row-major view

    if pack > 1:
        eye = jnp.eye(pack, dtype=w1.dtype)
        w1k, w2k = jnp.kron(eye, w1), jnp.kron(eye, w2)   # block-diagonal weights
        b1k, b2k = jnp.tile(b1, pack), jnp.tile(b2, pack)
    else:
        w1k, w2k, b1k, b2k = w1, w2, b1, b2
    w1k = w1k.astype(compute_dtype)
    w2k = w2k.astype(compute_dtype)
    b1k = b1k.reshape(1, Hp).astype(jnp.float32)
    b2k = b2k.reshape(1, Cp).astype(jnp.float32)

    # ---- Row tiling over M (packed): streaming, double-buffered pipeline.
    if Mp <= block_rows:
        tm = Mp                               # single full-extent block
    else:
        tm = max(8, (block_rows // 8) * 8)    # sublane-aligned tile
    grid = (pl.cdiv(Mp, tm),)

    row_spec = pl.BlockSpec((tm, Cp), lambda i: (i, 0))
    in_specs = [
        row_spec,                                    # x
        pl.BlockSpec((Cp, Hp), lambda i: (0, 0)),    # w1 (block-diagonal)
        pl.BlockSpec((1, Hp), lambda i: (0, 0)),     # b1
        pl.BlockSpec((Hp, Cp), lambda i: (0, 0)),    # w2 (block-diagonal)
        pl.BlockSpec((1, Cp), lambda i: (0, 0)),     # b2
    ]
    args = [x2, w1k, b1k, w2k, b2k]

    if training:
        if rng is None:
            rng = jax.random.PRNGKey(0)
        bits = jax.random.bits(rng, (Mp, Cp), dtype=jnp.uint32)
        in_specs = [row_spec] + in_specs
        args = [bits] + args

    kernel = functools.partial(_ffwd_kernel, training=training, p=p)

    out = pl.pallas_call(
        kernel,
        out_shape=jax.ShapeDtypeStruct((Mp, Cp), x.dtype),
        grid=grid,
        in_specs=in_specs,
        out_specs=row_spec,
        compiler_params=pltpu.CompilerParams(
            dimension_semantics=("parallel",),        # megacore / v7x 2-TC sharding
            vmem_limit_bytes=32 * 1024 * 1024),
    )(*args)

    return out.reshape(B, T, C)


def _init_params(key, n_embd=N_EMBD, hidden=HIDDEN):
    """Deterministic init mimicking torch.nn.Linear (uniform +-1/sqrt(fan_in)).

    Weights stored pre-transposed as (in, out) so the kernel does x @ W.
    """
    k1, k2, k3, k4 = jax.random.split(key, 4)
    lim1 = 1.0 / jnp.sqrt(n_embd)
    lim2 = 1.0 / jnp.sqrt(hidden)
    w1 = jax.random.uniform(k1, (n_embd, hidden), jnp.float32, -lim1, lim1)
    b1 = jax.random.uniform(k2, (hidden,), jnp.float32, -lim1, lim1)
    w2 = jax.random.uniform(k3, (hidden, n_embd), jnp.float32, -lim2, lim2)
    b2 = jax.random.uniform(k4, (n_embd,), jnp.float32, -lim2, lim2)
    return w1, b1, w2, b2


def _reference(x, w1, b1, w2, b2):
    hi = jax.lax.Precision.HIGHEST
    h = jnp.maximum(jnp.dot(x, w1, precision=hi) + b1, 0.0)
    return jnp.dot(h, w2, precision=hi) + b2   # eval-mode dropout = identity


if __name__ == "__main__":
    key = jax.random.PRNGKey(0)
    kx, kp, kd = jax.random.split(key, 3)

    B, T = 2, 8
    x = jax.random.normal(kx, (B, T, N_EMBD), dtype=jnp.float32)
    w1, b1, w2, b2 = _init_params(kp)

    # Eval-mode forward (matches torch module.eval()).
    y = jax.block_until_ready(feedforward(x, w1, b1, w2, b2, training=False))
    y_ref = _reference(x, w1, b1, w2, b2)
    assert y.shape == (B, T, N_EMBD)
    # Loose-ish tolerance: covers MXU f32 multi-pass decomposition differences.
    assert jnp.allclose(y, y_ref, atol=2e-2, rtol=2e-2), "eval mismatch vs reference"

    # Train-mode inverted dropout: kept elements equal eval output / (1-p),
    # dropped elements are exactly zero, drop rate ~ p.
    y_tr = jax.block_until_ready(
        feedforward(x, w1, b1, w2, b2, training=True, rng=kd))
    assert y_tr.shape == (B, T, N_EMBD)
    kept = y_tr != 0.0
    assert jnp.allclose(jnp.where(kept, y_tr * (1.0 - DROPOUT_P), 0.0),
                        jnp.where(kept, y, 0.0), atol=1e-4, rtol=1e-4), \
        "train-mode kept values do not match eval output / (1-p)"
    drop_frac = 1.0 - float(jnp.mean(kept.astype(jnp.float32)))
    assert 0.02 < drop_frac < 0.5, f"unexpected dropout rate {drop_frac}"

    print("KERNEL_OK")
</pallas_src>

<mosaic_0001>
module attributes {stable_mosaic.version = 11 : i64} {
  func.func @_ffwd_kernel(%arg0: i32, %arg1: memref<4x128xf32, #tpu.memory_space<vmem>>, %arg2: memref<128x512xf32, #tpu.memory_space<vmem>>, %arg3: memref<1x512xf32, #tpu.memory_space<vmem>>, %arg4: memref<512x128xf32, #tpu.memory_space<vmem>>, %arg5: memref<1x128xf32, #tpu.memory_space<vmem>>, %arg6: memref<4x128xf32, #tpu.memory_space<vmem>>) attributes {dimension_semantics = [#tpu.dimension_semantics<parallel>], iteration_bounds = array<i64: 1>, scalar_prefetch = 0 : i64, scratch_operands = 0 : i64, tpu.core_type = #tpu.core_type<tc>, window_params = [{transform_indices = @transform_0, window_bounds = array<i64: 4, 128>}, {pipeline_mode = #tpu.pipeline_mode<synchronous>, transform_indices = @transform_1, window_bounds = array<i64: 128, 512>}, {pipeline_mode = #tpu.pipeline_mode<synchronous>, transform_indices = @transform_2, window_bounds = array<i64: 1, 512>}, {pipeline_mode = #tpu.pipeline_mode<synchronous>, transform_indices = @transform_3, window_bounds = array<i64: 512, 128>}, {pipeline_mode = #tpu.pipeline_mode<synchronous>, transform_indices = @transform_4, window_bounds = array<i64: 1, 128>}, {transform_indices = @transform_5, window_bounds = array<i64: 4, 128>}]} {
    %c0 = arith.constant 0 : index
    %c0_0 = arith.constant 0 : index
    %0 = vector.load %arg1[%c0, %c0_0] : memref<4x128xf32, #tpu.memory_space<vmem>>, vector<4x128xf32>
    %c0_1 = arith.constant 0 : index
    %c0_2 = arith.constant 0 : index
    %1 = vector.load %arg2[%c0_1, %c0_2] : memref<128x512xf32, #tpu.memory_space<vmem>>, vector<128x512xf32>
    %cst = arith.constant dense<0.000000e+00> : vector<4x512xf32>
    %2 = tpu.matmul %0, %1, %cst {dimension_numbers = #tpu.dot_dimension_numbers<[1], [0], [0], [1], [0, 0, 1, 1], [], []>} : vector<4x128xf32>, vector<128x512xf32>, vector<4x512xf32> -> vector<4x512xf32>
    %c0_3 = arith.constant 0 : index
    %c0_4 = arith.constant 0 : index
    %3 = vector.load %arg3[%c0_3, %c0_4] : memref<1x512xf32, #tpu.memory_space<vmem>>, vector<1x512xf32>
    %4 = vector.broadcast %3 : vector<1x512xf32> to vector<4x512xf32>
    %5 = arith.addf %2, %4 : vector<4x512xf32>
    %cst_5 = arith.constant 0.000000e+00 : f32
    %6 = vector.broadcast %cst_5 : f32 to vector<4x512xf32>
    %7 = arith.maximumf %5, %6 : vector<4x512xf32>
    %c0_6 = arith.constant 0 : index
    %c0_7 = arith.constant 0 : index
    %8 = vector.load %arg4[%c0_6, %c0_7] : memref<512x128xf32, #tpu.memory_space<vmem>>, vector<512x128xf32>
    %cst_8 = arith.constant dense<0.000000e+00> : vector<4x128xf32>
    %9 = tpu.matmul %7, %8, %cst_8 {dimension_numbers = #tpu.dot_dimension_numbers<[1], [0], [0], [1], [0, 0, 1, 1], [], []>} : vector<4x512xf32>, vector<512x128xf32>, vector<4x128xf32> -> vector<4x128xf32>
    %c0_9 = arith.constant 0 : index
    %c0_10 = arith.constant 0 : index
    %10 = vector.load %arg5[%c0_9, %c0_10] : memref<1x128xf32, #tpu.memory_space<vmem>>, vector<1x128xf32>
    %11 = vector.broadcast %10 : vector<1x128xf32> to vector<4x128xf32>
    %12 = arith.addf %9, %11 : vector<4x128xf32>
    %c0_11 = arith.constant 0 : index
    %c0_12 = arith.constant 0 : index
    %13 = vector.load %arg6[%c0_11, %c0_12] : memref<4x128xf32, #tpu.memory_space<vmem>>, vector<4x128xf32>
    tpu.vector_store %arg6[%c0_11, %c0_12], %12 {strides = array<i32>} : memref<4x128xf32, #tpu.memory_space<vmem>>, vector<4x128xf32>,
    return
  }
  func.func @transform_0(%arg0: i32) -> (i32, i32) {
    %c0_i32 = arith.constant 0 : i32
    %c0_i32_0 = arith.constant 0 : i32
    return %arg0, %c0_i32 : i32, i32
  }
  func.func @transform_1(%arg0: i32) -> (i32, i32) {
    %c0_i32 = arith.constant 0 : i32
    %c0_i32_0 = arith.constant 0 : i32
    %c0_i32_1 = arith.constant 0 : i32
    return %c0_i32, %c0_i32_0 : i32, i32
  }
  func.func @transform_2(%arg0: i32) -> (i32, i32) {
    %c0_i32 = arith.constant 0 : i32
    %c0_i32_0 = arith.constant 0 : i32
    %c0_i32_1 = arith.constant 0 : i32
    return %c0_i32, %c0_i32_0 : i32, i32
  }
  func.func @transform_3(%arg0: i32) -> (i32, i32) {
    %c0_i32 = arith.constant 0 : i32
    %c0_i32_0 = arith.constant 0 : i32
    %c0_i32_1 = arith.constant 0 : i32
    return %c0_i32, %c0_i32_0 : i32, i32
  }
  func.func @transform_4(%arg0: i32) -> (i32, i32) {
    %c0_i32 = arith.constant 0 : i32
    %c0_i32_0 = arith.constant 0 : i32
    %c0_i32_1 = arith.constant 0 : i32
    return %c0_i32, %c0_i32_0 : i32, i32
  }
  func.func @transform_5(%arg0: i32) -> (i32, i32) {
    %c0_i32 = arith.constant 0 : i32
    %c0_i32_0 = arith.constant 0 : i32
    return %arg0, %c0_i32 : i32, i32
  }
}

</mosaic_0001>

<llo_original>
// kernel: tpu_custom_call.1
$region0: #{tpu_custom_call.1}
  #allocation0 [shape = 'u32[]', space=smem, size = 0x4, offset = 0x4, fixed_abs, tag = 'smem constant byte address 0x4 - core index']
  #allocation1 [shape = 'u32[72,128]{1,0:T(1,128)}', space=vmem, size = 0x9000, scoped, tag = 'internal scratch']
  %s0 = inlined_call_operand.hbm [shape: f32[4,128], index: 0, kind: input, shape index: {}]
  %s1 = inlined_call_operand.hbm [shape: f32[128,512], index: 1, kind: input, shape index: {}]
  %s2 = inlined_call_operand.hbm [shape: f32[1,512], index: 2, kind: input, shape index: {}]
  %s3 = inlined_call_operand.hbm [shape: f32[512,128], index: 3, kind: input, shape index: {}]
  %s4 = inlined_call_operand.vmem [shape: f32[1,128], index: 4, kind: input, shape index: {}]
  %s5 = inlined_call_operand.hbm [shape: f32[4,128], index: 5, kind: output, shape index: {}]
  %s6 = sld [smem:[#allocation0]]
  $region46: #{tpu_custom_call.1} parent=0
    _
  %s8 = ssub.s32 1, %s6
  %s9 = scalar_select 0, %s8, %s6
  $region1: #{tpu_custom_call.1} parent=0
    #allocation2 [shape = 'u8[2048]{0}', space=vmem, size = 0x800, scoped, tag = 'input window, operand 0, single buffered']
    #allocation3 [shape = 's32[1]{0}', space=sflag, size = 0x4, scoped, tag = 'scoped memory for tpu_custom_call.1']
    #allocation4 [shape = 's32[1]{0}', space=sflag, size = 0x4, scoped, tag = 'scoped memory for tpu_custom_call.1']
    #allocation5 [shape = 'u8[262144]{0}', space=vmem, size = 0x40000, scoped, tag = 'input window, operand 1, single buffered']
    #allocation6 [shape = 's32[1]{0}', space=sflag, size = 0x4, scoped, tag = 'scoped memory for tpu_custom_call.1']
    #allocation7 [shape = 'u8[2048]{0}', space=vmem, size = 0x800, scoped, tag = 'input window, operand 2, single buffered']
    #allocation8 [shape = 'u8[262144]{0}', space=vmem, size = 0x40000, scoped, tag = 'input window, operand 3, single buffered']
    #allocation9 [shape = 's32[1]{0}', space=sflag, size = 0x4, scoped, tag = 'scoped memory for tpu_custom_call.1']
    #allocation10 [shape = 'u8[2048]{0}', space=vmem, size = 0x800, scoped, tag = 'output window, operand 0, single buffered']
    %10 = vsyncpa [#allocation3], 0
    %11 = vsyncpa [#allocation6], 0
    %12 = vsyncpa [#allocation9], 0
    %13 = vsyncpa [#allocation4], 0
    // Predicated region
    $region2: #{tpu_custom_call.1} parent=1 // pred_check
      _
    $region3: #{tpu_custom_call.1} parent=1 // pred_check_branch
      %15 = sbr.rel (0) target = $region5
    $region4: #{tpu_custom_call.1} parent=1 // pred_region
      %17 = vsyncadd [#allocation3], 0
      %s19 = sshll.u32 %s0, 4
      %s20 = int_to_ptr.hbm [resolvable:$true] %s19
      %s21 = sshll.u32 [#allocation2], 4
      %s22 = int_to_ptr.vmem [resolvable:$true] %s21
      %24 = dma.hbm_to_vmem [thread:$0]  %s20, 64, %s22, [#allocation3]
    $region5: #{tpu_custom_call.1} parent=1 // pred_fallthru
      _
    // Predicated region
    $region6: #{tpu_custom_call.1} parent=1 // pred_check
      _
    $region7: #{tpu_custom_call.1} parent=1 // pred_check_branch
      %26 = sbr.rel (0) target = $region9
    $region8: #{tpu_custom_call.1} parent=1 // pred_region
      %28 = vsyncadd [#allocation6], 0
      %s29 = sshll.u32 %s1, 4
      %s30 = int_to_ptr.hbm [resolvable:$true] %s29
      %s31 = sshll.u32 [#allocation5], 4
      %s32 = int_to_ptr.vmem [resolvable:$true] %s31
      %37 = dma.hbm_to_vmem [thread:$0]  %s30, 8192, %s32, [#allocation6], 512, 512, 32
    $region9: #{tpu_custom_call.1} parent=1 // pred_fallthru
      _
    // Predicated region
    $region10: #{tpu_custom_call.1} parent=1 // pred_check
      _
    $region11: #{tpu_custom_call.1} parent=1 // pred_check_branch
      %39 = sbr.rel (0) target = $region13
    $region12: #{tpu_custom_call.1} parent=1 // pred_region
      %41 = vsyncadd [#allocation6], 0
      %s43 = sshll.u32 %s2, 4
      %s44 = int_to_ptr.hbm [resolvable:$true] %s43
      %s45 = sshll.u32 [#allocation7], 4
      %s46 = int_to_ptr.vmem [resolvable:$true] %s45
      %48 = dma.hbm_to_vmem [thread:$0]  %s44, 64, %s46, [#allocation6]
    $region13: #{tpu_custom_call.1} parent=1 // pred_fallthru
      _
    // Predicated region
    $region14: #{tpu_custom_call.1} parent=1 // pred_check
      _
    $region15: #{tpu_custom_call.1} parent=1 // pred_check_branch
      %50 = sbr.rel (0) target = $region17
    $region16: #{tpu_custom_call.1} parent=1 // pred_region
      %52 = vsyncadd [#allocation9], 0
      %s53 = sshll.u32 %s3, 4
      %s54 = int_to_ptr.hbm [resolvable:$true] %s53
      %s55 = sshll.u32 [#allocation8], 4
      %s56 = int_to_ptr.vmem [resolvable:$true] %s55
      %61 = dma.hbm_to_vmem [thread:$0]  %s54, 8192, %s56, [#allocation9], 128, 128, 8
    $region17: #{tpu_custom_call.1} parent=1 // pred_fallthru
      _
    // Predicated region
    $region18: #{tpu_custom_call.1} parent=1 // pred_check
      _
    $region19: #{tpu_custom_call.1} parent=1 // pred_check_branch
      %63 = sbr.rel (0) target = $region21
    $region20: #{tpu_custom_call.1} parent=1 // pred_region
      _
    $region21: #{tpu_custom_call.1} parent=1 // pred_fallthru
      _
    // Predicated region
    $region22: #{tpu_custom_call.1} parent=1 // pred_check
      _
    $region23: #{tpu_custom_call.1} parent=1 // pred_check_branch
      %65 = sbr.rel (0) target = $region25
    $region24: #{tpu_custom_call.1} parent=1 // pred_region
      %67 = dma.done [#allocation3], 64
    $region25: #{tpu_custom_call.1} parent=1 // pred_fallthru
      _
    // Predicated region
    $region26: #{tpu_custom_call.1} parent=1 // pred_check
      _
    $region27: #{tpu_custom_call.1} parent=1 // pred_check_branch
      %69 = sbr.rel (0) target = $region29
    $region28: #{tpu_custom_call.1} parent=1 // pred_region
      %71 = dma.done [#allocation6], 8192
    $region29: #{tpu_custom_call.1} parent=1 // pred_fallthru
      _
    // Predicated region
    $region30: #{tpu_custom_call.1} parent=1 // pred_check
      _
    $region31: #{tpu_custom_call.1} parent=1 // pred_check_branch
      %73 = sbr.rel (0) target = $region33
    $region32: #{tpu_custom_call.1} parent=1 // pred_region
      %75 = dma.done [#allocation6], 64
    $region33: #{tpu_custom_call.1} parent=1 // pred_fallthru
      _
    // Predicated region
    $region34: #{tpu_custom_call.1} parent=1 // pred_check
      _
    $region35: #{tpu_custom_call.1} parent=1 // pred_check_branch
      %77 = sbr.rel (0) target = $region37
    $region36: #{tpu_custom_call.1} parent=1 // pred_region
      %79 = dma.done [#allocation9], 8192
    $region37: #{tpu_custom_call.1} parent=1 // pred_fallthru
      _
    %v80 = vld [vmem:[#allocation2] sm:$0xf]
    %v81 = vld [vmem:[#allocation5] sm:$0xff]
    %v82 = vld [vmem:[#allocation5 + $0x8] sm:$0xff]
    %v83 = vld [vmem:[#allocation5 + $0x10] sm:$0xff]
    %v84 = vld [vmem:[#allocation5 + $0x18] sm:$0xff]
    %v85 = vld [vmem:[#allocation5 + $0x20] sm:$0xff]
    %v86 = vld [vmem:[#allocation5 + $0x28] sm:$0xff]
    %v87 = vld [vmem:[#allocation5 + $0x30] sm:$0xff]
    %v88 = vld [vmem:[#allocation5 + $0x38] sm:$0xff]
    %v89 = vld [vmem:[#allocation5 + $0x40] sm:$0xff]
    %v90 = vld [vmem:[#allocation5 + $0x48] sm:$0xff]
    %v91 = vld [vmem:[#allocation5 + $0x50] sm:$0xff]
    %v92 = vld [vmem:[#allocation5 + $0x58] sm:$0xff]
    %v93 = vld [vmem:[#allocation5 + $0x60] sm:$0xff]
    %v94 = vld [vmem:[#allocation5 + $0x68] sm:$0xff]
    %v95 = vld [vmem:[#allocation5 + $0x70] sm:$0xff]
    %v96 = vld [vmem:[#allocation5 + $0x78] sm:$0xff]
    %v97 = vld [vmem:[#allocation5 + $0x80] sm:$0xff]
    %v98 = vld [vmem:[#allocation5 + $0x88] sm:$0xff]
    %v99 = vld [vmem:[#allocation5 + $0x90] sm:$0xff]
    %v100 = vld [vmem:[#allocation5 + $0x98] sm:$0xff]
    %v101 = vld [vmem:[#allocation5 + $0xa0] sm:$0xff]
    %v102 = vld [vmem:[#allocation5 + $0xa8] sm:$0xff]
    %v103 = vld [vmem:[#allocation5 + $0xb0] sm:$0xff]
    %v104 = vld [vmem:[#allocation5 + $0xb8] sm:$0xff]
    %v105 = vld [vmem:[#allocation5 + $0xc0] sm:$0xff]
    %v106 = vld [vmem:[#allocation5 + $0xc8] sm:$0xff]
    %v107 = vld [vmem:[#allocation5 + $0xd0] sm:$0xff]
    %v108 = vld [vmem:[#allocation5 + $0xd8] sm:$0xff]
    %v109 = vld [vmem:[#allocation5 + $0xe0] sm:$0xff]
    %v110 = vld [vmem:[#allocation5 + $0xe8] sm:$0xff]
    %v111 = vld [vmem:[#allocation5 + $0xf0] sm:$0xff]
    %v112 = vld [vmem:[#allocation5 + $0xf8] sm:$0xff]
    %v113 = vld [vmem:[#allocation5 + $0x100] sm:$0xff]
    %v114 = vld [vmem:[#allocation5 + $0x108] sm:$0xff]
    %v115 = vld [vmem:[#allocation5 + $0x110] sm:$0xff]
    %v116 = vld [vmem:[#allocation5 + $0x118] sm:$0xff]
    %v117 = vld [vmem:[#allocation5 + $0x120] sm:$0xff]
    %v118 = vld [vmem:[#allocation5 + $0x128] sm:$0xff]
    %v119 = vld [vmem:[#allocation5 + $0x130] sm:$0xff]
    %v120 = vld [vmem:[#allocation5 + $0x138] sm:$0xff]
    %v121 = vld [vmem:[#allocation5 + $0x140] sm:$0xff]
    %v122 = vld [vmem:[#allocation5 + $0x148] sm:$0xff]
    %v123 = vld [vmem:[#allocation5 + $0x150] sm:$0xff]
    %v124 = vld [vmem:[#allocation5 + $0x158] sm:$0xff]
    %v125 = vld [vmem:[#allocation5 + $0x160] sm:$0xff]
    %v126 = vld [vmem:[#allocation5 + $0x168] sm:$0xff]
    %v127 = vld [vmem:[#allocation5 + $0x170] sm:$0xff]
    %v128 = vld [vmem:[#allocation5 + $0x178] sm:$0xff]
    %v129 = vld [vmem:[#allocation5 + $0x180] sm:$0xff]
    %v130 = vld [vmem:[#allocation5 + $0x188] sm:$0xff]
    %v131 = vld [vmem:[#allocation5 + $0x190] sm:$0xff]
    %v132 = vld [vmem:[#allocation5 + $0x198] sm:$0xff]
    %v133 = vld [vmem:[#allocation5 + $0x1a0] sm:$0xff]
    %v134 = vld [vmem:[#allocation5 + $0x1a8] sm:$0xff]
    %v135 = vld [vmem:[#allocation5 + $0x1b0] sm:$0xff]
    %v136 = vld [vmem:[#allocation5 + $0x1b8] sm:$0xff]
    %v137 = vld [vmem:[#allocation5 + $0x1c0] sm:$0xff]
    %v138 = vld [vmem:[#allocation5 + $0x1c8] sm:$0xff]
    %v139 = vld [vmem:[#allocation5 + $0x1d0] sm:$0xff]
    %v140 = vld [vmem:[#allocation5 + $0x1d8] sm:$0xff]
    %v141 = vld [vmem:[#allocation5 + $0x1e0] sm:$0xff]
    %v142 = vld [vmem:[#allocation5 + $0x1e8] sm:$0xff]
    %v143 = vld [vmem:[#allocation5 + $0x1f0] sm:$0xff]
    %v144 = vld [vmem:[#allocation5 + $0x1f8] sm:$0xff]
    %v145 = vld [vmem:[#allocation7] sm:$0xf]
    %v147 = vperm.slane %v145, 0
    %v148 = vperm.slane %v145, 1
    %v149 = vperm.slane %v145, 2
    %v150 = vperm.slane %v145, 3
    %155 = vmatpush.msra.mxu0 %v141
    %156 = vmatpush.msra.mxu0 %v137
    %157 = vmatpush.msra.mxu0 %v133
    %158 = vmatpush.msra.mxu0 %v129
    %159 = vmatpush.msra.mxu0 %v125
    %160 = vmatpush.msra.mxu0 %v121
    %161 = vmatpush.msra.mxu0 %v117
    %162 = vmatpush.msra.mxu0 %v113
    %163 = vmatpush.msra.mxu0 %v109
    %164 = vmatpush.msra.mxu0 %v105
    %165 = vmatpush.msra.mxu0 %v101
    %166 = vmatpush.msra.mxu0 %v97
    %167 = vmatpush.msra.mxu0 %v93
    %168 = vmatpush.msra.mxu0 %v89
    %169 = vmatpush.msra.mxu0 %v85
    %170 = vmatpush.msra.mxu0 %v81
    %171 = vmatmul.f32.gmra.mxu0 %v80
    %v172 = vpop.f32.mrf.mxu0
    %v173 = vadd.f32 %v147, %v172
    %174 = vdwg.mxu0
    %175 = vmatpush.msra.mxu0 %v142
    %176 = vmatpush.msra.mxu0 %v138
    %177 = vmatpush.msra.mxu0 %v134
    %178 = vmatpush.msra.mxu0 %v130
    %179 = vmatpush.msra.mxu0 %v126
    %180 = vmatpush.msra.mxu0 %v122
    %181 = vmatpush.msra.mxu0 %v118
    %182 = vmatpush.msra.mxu0 %v114
    %183 = vmatpush.msra.mxu0 %v110
    %184 = vmatpush.msra.mxu0 %v106
    %185 = vmatpush.msra.mxu0 %v102
    %186 = vmatpush.msra.mxu0 %v98
    %187 = vmatpush.msra.mxu0 %v94
    %188 = vmatpush.msra.mxu0 %v90
    %189 = vmatpush.msra.mxu0 %v86
    %190 = vmatpush.msra.mxu0 %v82
    %191 = vmatmul.f32.gmra.mxu0 %v80
    %v192 = vpop.f32.mrf.mxu0
    %v193 = vadd.f32 %v148, %v192
    %194 = vdwg.mxu0
    %195 = vmatpush.msra.mxu0 %v143
    %196 = vmatpush.msra.mxu0 %v139
    %197 = vmatpush.msra.mxu0 %v135
    %198 = vmatpush.msra.mxu0 %v131
    %199 = vmatpush.msra.mxu0 %v127
    %200 = vmatpush.msra.mxu0 %v123
    %201 = vmatpush.msra.mxu0 %v119
    %202 = vmatpush.msra.mxu0 %v115
    %203 = vmatpush.msra.mxu0 %v111
    %204 = vmatpush.msra.mxu0 %v107
    %205 = vmatpush.msra.mxu0 %v103
    %206 = vmatpush.msra.mxu0 %v99
    %207 = vmatpush.msra.mxu0 %v95
    %208 = vmatpush.msra.mxu0 %v91
    %209 = vmatpush.msra.mxu0 %v87
    %210 = vmatpush.msra.mxu0 %v83
    %211 = vmatmul.f32.gmra.mxu0 %v80
    %v212 = vpop.f32.mrf.mxu0
    %v213 = vadd.f32 %v149, %v212
    %214 = vdwg.mxu0
    %215 = vmatpush.msra.mxu0 %v144
    %216 = vmatpush.msra.mxu0 %v140
    %217 = vmatpush.msra.mxu0 %v136
    %218 = vmatpush.msra.mxu0 %v132
    %219 = vmatpush.msra.mxu0 %v128
    %220 = vmatpush.msra.mxu0 %v124
    %221 = vmatpush.msra.mxu0 %v120
    %222 = vmatpush.msra.mxu0 %v116
    %223 = vmatpush.msra.mxu0 %v112
    %224 = vmatpush.msra.mxu0 %v108
    %225 = vmatpush.msra.mxu0 %v104
    %226 = vmatpush.msra.mxu0 %v100
    %227 = vmatpush.msra.mxu0 %v96
    %228 = vmatpush.msra.mxu0 %v92
    %229 = vmatpush.msra.mxu0 %v88
    %230 = vmatpush.msra.mxu0 %v84
    %231 = vmatmul.f32.gmra.mxu0 %v80
    %v232 = vpop.f32.mrf.mxu0
    %v233 = vadd.f32 %v150, %v232
    %234 = vdwg.mxu0
    %v235 = vmax.f32 %v173, 0.0
    %v236 = vmax.f32 %v193, 0.0
    %v237 = vmax.f32 %v213, 0.0
    %v238 = vmax.f32 %v233, 0.0
    %v239 = vld [vmem:[#allocation8] sm:$0xff]
    %v240 = vld [vmem:[#allocation8 + $0x8] sm:$0xff]
    %v241 = vld [vmem:[#allocation8 + $0x10] sm:$0xff]
    %v242 = vld [vmem:[#allocation8 + $0x18] sm:$0xff]
    %v243 = vld [vmem:[#allocation8 + $0x20] sm:$0xff]
    %v244 = vld [vmem:[#allocation8 + $0x28] sm:$0xff]
    %v245 = vld [vmem:[#allocation8 + $0x30] sm:$0xff]
    %v246 = vld [vmem:[#allocation8 + $0x38] sm:$0xff]
    %v247 = vld [vmem:[#allocation8 + $0x40] sm:$0xff]
    %v248 = vld [vmem:[#allocation8 + $0x48] sm:$0xff]
    %v249 = vld [vmem:[#allocation8 + $0x50] sm:$0xff]
    %v250 = vld [vmem:[#allocation8 + $0x58] sm:$0xff]
    %v251 = vld [vmem:[#allocation8 + $0x60] sm:$0xff]
    %v252 = vld [vmem:[#allocation8 + $0x68] sm:$0xff]
    %v253 = vld [vmem:[#allocation8 + $0x70] sm:$0xff]
    %v254 = vld [vmem:[#allocation8 + $0x78] sm:$0xff]
    %v255 = vld [vmem:[#allocation8 + $0x80] sm:$0xff]
    %v256 = vld [vmem:[#allocation8 + $0x88] sm:$0xff]
    %v257 = vld [vmem:[#allocation8 + $0x90] sm:$0xff]
    %v258 = vld [vmem:[#allocation8 + $0x98] sm:$0xff]
    %v259 = vld [vmem:[#allocation8 + $0xa0] sm:$0xff]
    %v260 = vld [vmem:[#allocation8 + $0xa8] sm:$0xff]
    %v261 = vld [vmem:[#allocation8 + $0xb0] sm:$0xff]
    %v262 = vld [vmem:[#allocation8 + $0xb8] sm:$0xff]
    %v263 = vld [vmem:[#allocation8 + $0xc0] sm:$0xff]
    %v264 = vld [vmem:[#allocation8 + $0xc8] sm:$0xff]
    %v265 = vld [vmem:[#allocation8 + $0xd0] sm:$0xff]
    %v266 = vld [vmem:[#allocation8 + $0xd8] sm:$0xff]
    %v267 = vld [vmem:[#allocation8 + $0xe0] sm:$0xff]
    %v268 = vld [vmem:[#allocation8 + $0xe8] sm:$0xff]
    %v269 = vld [vmem:[#allocation8 + $0xf0] sm:$0xff]
    %v270 = vld [vmem:[#allocation8 + $0xf8] sm:$0xff]
    %v271 = vld [vmem:[#allocation8 + $0x100] sm:$0xff]
    %v272 = vld [vmem:[#allocation8 + $0x108] sm:$0xff]
    %v273 = vld [vmem:[#allocation8 + $0x110] sm:$0xff]
    %v274 = vld [vmem:[#allocation8 + $0x118] sm:$0xff]
    %v275 = vld [vmem:[#allocation8 + $0x120] sm:$0xff]
    %v276 = vld [vmem:[#allocation8 + $0x128] sm:$0xff]
    %v277 = vld [vmem:[#allocation8 + $0x130] sm:$0xff]
    %v278 = vld [vmem:[#allocation8 + $0x138] sm:$0xff]
    %v279 = vld [vmem:[#allocation8 + $0x140] sm:$0xff]
    %v280 = vld [vmem:[#allocation8 + $0x148] sm:$0xff]
    %v281 = vld [vmem:[#allocation8 + $0x150] sm:$0xff]
    %v282 = vld [vmem:[#allocation8 + $0x158] sm:$0xff]
    %v283 = vld [vmem:[#allocation8 + $0x160] sm:$0xff]
    %v284 = vld [vmem:[#allocation8 + $0x168] sm:$0xff]
    %v285 = vld [vmem:[#allocation8 + $0x170] sm:$0xff]
    %v286 = vld [vmem:[#allocation8 + $0x178] sm:$0xff]
    %v287 = vld [vmem:[#allocation8 + $0x180] sm:$0xff]
    %v288 = vld [vmem:[#allocation8 + $0x188] sm:$0xff]
    %v289 = vld [vmem:[#allocation8 + $0x190] sm:$0xff]
    %v290 = vld [vmem:[#allocation8 + $0x198] sm:$0xff]
    %v291 = vld [vmem:[#allocation8 + $0x1a0] sm:$0xff]
    %v292 = vld [vmem:[#allocation8 + $0x1a8] sm:$0xff]
    %v293 = vld [vmem:[#allocation8 + $0x1b0] sm:$0xff]
    %v294 = vld [vmem:[#allocation8 + $0x1b8] sm:$0xff]
    %v295 = vld [vmem:[#allocation8 + $0x1c0] sm:$0xff]
    %v296 = vld [vmem:[#allocation8 + $0x1c8] sm:$0xff]
    %v297 = vld [vmem:[#allocation8 + $0x1d0] sm:$0xff]
    %v298 = vld [vmem:[#allocation8 + $0x1d8] sm:$0xff]
    %v299 = vld [vmem:[#allocation8 + $0x1e0] sm:$0xff]
    %v300 = vld [vmem:[#allocation8 + $0x1e8] sm:$0xff]
    %v301 = vld [vmem:[#allocation8 + $0x1f0] sm:$0xff]
    %v302 = vld [vmem:[#allocation8 + $0x1f8] sm:$0xff]
    %v303 = vld [vmem:[%s4] sm:$0x1]
    %v305 = vperm.slane %v303, 0
    %307 = vmatpush.msra.mxu0 %v254
    %308 = vmatpush.msra.mxu0 %v253
    %309 = vmatpush.msra.mxu0 %v252
    %310 = vmatpush.msra.mxu0 %v251
    %311 = vmatpush.msra.mxu0 %v250
    %312 = vmatpush.msra.mxu0 %v249
    %313 = vmatpush.msra.mxu0 %v248
    %314 = vmatpush.msra.mxu0 %v247
    %315 = vmatpush.msra.mxu0 %v246
    %316 = vmatpush.msra.mxu0 %v245
    %317 = vmatpush.msra.mxu0 %v244
    %318 = vmatpush.msra.mxu0 %v243
    %319 = vmatpush.msra.mxu0 %v242
    %320 = vmatpush.msra.mxu0 %v241
    %321 = vmatpush.msra.mxu0 %v240
    %322 = vmatpush.msra.mxu0 %v239
    %323 = vmatmul.f32.gmra.mxu0 %v235
    %v324 = vpop.f32.mrf.mxu0
    %v325 = vadd.f32 %v305, %v324
    %326 = vdwg.mxu0
    %327 = vmatpush.msra.mxu0 %v270
    %328 = vmatpush.msra.mxu0 %v269
    %329 = vmatpush.msra.mxu0 %v268
    %330 = vmatpush.msra.mxu0 %v267
    %331 = vmatpush.msra.mxu0 %v266
    %332 = vmatpush.msra.mxu0 %v265
    %333 = vmatpush.msra.mxu0 %v264
    %334 = vmatpush.msra.mxu0 %v263
    %335 = vmatpush.msra.mxu0 %v262
    %336 = vmatpush.msra.mxu0 %v261
    %337 = vmatpush.msra.mxu0 %v260
    %338 = vmatpush.msra.mxu0 %v259
    %339 = vmatpush.msra.mxu0 %v258
    %340 = vmatpush.msra.mxu0 %v257
    %341 = vmatpush.msra.mxu0 %v256
    %342 = vmatpush.msra.mxu0 %v255
    %343 = vmatmul.f32.gmra.mxu0 %v236
    %v344 = vpop.f32.mrf.mxu0
    %v345 = vadd.f32 %v325, %v344
    %346 = vdwg.mxu0
    %347 = vmatpush.msra.mxu0 %v286
    %348 = vmatpush.msra.mxu0 %v285
    %349 = vmatpush.msra.mxu0 %v284
    %350 = vmatpush.msra.mxu0 %v283
    %351 = vmatpush.msra.mxu0 %v282
    %352 = vmatpush.msra.mxu0 %v281
    %353 = vmatpush.msra.mxu0 %v280
    %354 = vmatpush.msra.mxu0 %v279
    %355 = vmatpush.msra.mxu0 %v278
    %356 = vmatpush.msra.mxu0 %v277
    %357 = vmatpush.msra.mxu0 %v276
    %358 = vmatpush.msra.mxu0 %v275
    %359 = vmatpush.msra.mxu0 %v274
    %360 = vmatpush.msra.mxu0 %v273
    %361 = vmatpush.msra.mxu0 %v272
    %362 = vmatpush.msra.mxu0 %v271
    %363 = vmatmul.f32.gmra.mxu0 %v237
    %v364 = vpop.f32.mrf.mxu0
    %v365 = vadd.f32 %v345, %v364
    %366 = vdwg.mxu0
    %367 = vmatpush.msra.mxu0 %v302
    %368 = vmatpush.msra.mxu0 %v301
    %369 = vmatpush.msra.mxu0 %v300
    %370 = vmatpush.msra.mxu0 %v299
    %371 = vmatpush.msra.mxu0 %v298
    %372 = vmatpush.msra.mxu0 %v297
    %373 = vmatpush.msra.mxu0 %v296
    %374 = vmatpush.msra.mxu0 %v295
    %375 = vmatpush.msra.mxu0 %v294
    %376 = vmatpush.msra.mxu0 %v293
    %377 = vmatpush.msra.mxu0 %v292
    %378 = vmatpush.msra.mxu0 %v291
    %379 = vmatpush.msra.mxu0 %v290
    %380 = vmatpush.msra.mxu0 %v289
    %381 = vmatpush.msra.mxu0 %v288
    %382 = vmatpush.msra.mxu0 %v287
    %383 = vmatmul.f32.gmra.mxu0 %v238
    %v384 = vpop.f32.mrf.mxu0
    %v385 = vadd.f32 %v365, %v384
    %386 = vdwg.mxu0
    %387 = vst [vmem:[#allocation10] sm:$0xf] %v385
    // Predicated region
    $region38: #{tpu_custom_call.1} parent=1 // pred_check
      _
    $region39: #{tpu_custom_call.1} parent=1 // pred_check_branch
      %389 = sbr.rel (0) target = $region41
    $region40: #{tpu_custom_call.1} parent=1 // pred_region
      %391 = vsyncadd [#allocation4], 0
      %s393 = sshll.u32 [#allocation10], 4
      %s394 = int_to_ptr.vmem [resolvable:$true] %s393
      %s395 = sshll.u32 %s5, 4
      %s396 = int_to_ptr.hbm [resolvable:$true] %s395
      %398 = dma.vmem_to_hbm [thread:$0]  %s394, 64, %s396, [#allocation4]
    $region41: #{tpu_custom_call.1} parent=1 // pred_fallthru
      _
    // Predicated region
    $region42: #{tpu_custom_call.1} parent=1 // pred_check
      _
    $region43: #{tpu_custom_call.1} parent=1 // pred_check_branch
      %400 = sbr.rel (0) target = $region45
    $region44: #{tpu_custom_call.1} parent=1 // pred_region
      %402 = dma.done [#allocation4], 64
    $region45: #{tpu_custom_call.1} parent=1 // pred_fallthru
      _
    %403 = vsyncpa [#allocation3], 1
    %404 = vsyncpa [#allocation6], 1
    %405 = vsyncpa [#allocation9], 1
    %406 = vsyncpa [#allocation4], 1

</llo_original>
